<compile_context>
chip_gen: v7x
topology: tpu7x:2x2x1
jax: 0.10.0
libtpu: 0.0.40
codegen_flags: <defaults>
</compile_context>

<pallas_src>
import functools

import jax
import jax.numpy as jnp
from jax import lax
from jax.experimental import pallas as pl
from jax.experimental.pallas import tpu as pltpu


def _round_up(x, m):
    return ((x + m - 1) // m) * m


def _wbce_kernel(pred_ref, gt_ref, out_ref, spos_ref, sneg_ref, nneg_ref, *,
                 plane_elems, n_planes, block_p, block_l,
                 mask_planes, mask_lanes):
    # pred_ref / gt_ref: (P, TL) VMEM blocks.  out_ref: (1, 1, 1) per-plane-block
    # partial sum (resident across the lane-tile axis).  Scratches: (P, 1) f32
    # running partials across lane tiles.
    l = pl.program_id(1)

    @pl.when(l == 0)
    def _():
        spos_ref[...] = jnp.zeros_like(spos_ref)
        sneg_ref[...] = jnp.zeros_like(sneg_ref)
        nneg_ref[...] = jnp.zeros_like(nneg_ref)

    pred = pred_ref[...].astype(jnp.float32)          # (P, TL)
    gt = gt_ref[...].astype(jnp.float32)              # (P, TL) (gt may arrive narrow)

    is_pos = gt == 1.0
    is_neg = gt == 0.0

    # Ragged-tail masking (only emitted when shapes are actually ragged).
    valid = None
    if mask_planes:
        row = (lax.broadcasted_iota(jnp.int32, (block_p, 1), 0)
               + pl.program_id(0) * block_p)
        valid = row < n_planes                         # (P, 1)
    if mask_lanes:
        col = lax.broadcasted_iota(jnp.int32, (1, block_l), 1) + l * block_l
        lane_ok = col < plane_elems                    # (1, TL)
        valid = lane_ok if valid is None else jnp.logical_and(valid, lane_ok)
    if valid is not None:
        is_pos = jnp.logical_and(is_pos, valid)
        is_neg = jnp.logical_and(is_neg, valid)

    # Single log per element (EUP slot): pred for positives, 1-pred otherwise.
    # Invalid (padding) elements are forced to log(1) = 0 before the log so any
    # garbage in the OOB region of a ragged block cannot produce NaN/Inf.
    p_sel = jnp.where(is_pos, pred, 1.0 - pred)
    if valid is not None:
        p_sel = jnp.where(valid, p_sel, 1.0)
    neglog = -jnp.maximum(jnp.log(p_sel), -100.0)      # torch BCE clamp

    spos_ref[...] += jnp.sum(jnp.where(is_pos, neglog, 0.0), axis=-1,
                             keepdims=True)
    sneg_ref[...] += jnp.sum(jnp.where(is_neg, neglog, 0.0), axis=-1,
                             keepdims=True)
    nneg_ref[...] += jnp.sum(jnp.where(is_neg, 1.0, 0.0), axis=-1,
                             keepdims=True)

    @pl.when(l == pl.num_programs(1) - 1)
    def _():
        total = jnp.float32(plane_elems)
        neg_cap = jnp.float32(int(plane_elems * 0.2))  # torch.clamp(..., max=int(h*w*0.2))
        num_neg = jnp.minimum(nneg_ref[...], neg_cap)  # (P, 1)
        num_pos = total - num_neg
        # alpha_pos * s_pos + alpha_neg * s_neg, with alphas as per-plane scalars.
        contrib = 0.5 * total * (spos_ref[...] / num_pos
                                 + sneg_ref[...] / num_neg)
        if mask_planes:
            row = (lax.broadcasted_iota(jnp.int32, (block_p, 1), 0)
                   + pl.program_id(0) * block_p)
            contrib = jnp.where(row < n_planes, contrib, 0.0)
        out_ref[...] = jnp.sum(contrib).reshape(1, 1, 1)


def weight_balance_bce_loss(pred, gt):
    """pred, gt: (b, c, h, w); pred in (0, 1), gt a {0, 1} mask.

    gt may be passed in a narrow dtype (bool / int8 / bf16) to cut HBM traffic;
    it is cast in-kernel, never in the wrapper.
    """
    b, c, h, w = gt.shape
    n_planes = b * c
    plane_elems = h * w

    # Lane-dense layout: one plane per row, h*w along the 128-lane axis.
    # Pure reshape - no padding, no extra HBM pass.
    pred2 = pred.reshape(n_planes, plane_elems)
    gt2 = gt.reshape(n_planes, plane_elems)

    item_p = int(pred2.dtype.itemsize)
    item_g = int(gt2.dtype.itemsize)
    bpe = item_p + item_g                           # combined streamed bytes/elem
    sub_mult = max(8, 32 // min(item_p, item_g))    # packed-sublane multiple
    l_pad = _round_up(plane_elems, 128)

    # Generation-aware block budget and scoped-VMEM limit.
    try:
        vmem_cap = int(pltpu.get_tpu_info().vmem_capacity_bytes)
    except Exception:  # be conservative if the query is unavailable
        vmem_cap = 64 * 1024 * 1024
    if vmem_cap >= 100 * 1024 * 1024:      # v5e / v6e (128 MiB physical VMEM)
        block_budget = 8 * 1024 * 1024      # combined (pred+gt) bytes per block
    else:                                   # v7x (64 MiB physical VMEM)
        block_budget = 6 * 1024 * 1024
    vmem_limit = min((vmem_cap * 3) // 4, 64 * 1024 * 1024)

    if sub_mult * l_pad * bpe <= block_budget:
        # Small/medium planes: whole plane per block, grow the plane count.
        tl = l_pad
        p = (block_budget // (l_pad * bpe)) // sub_mult * sub_mult
        p = max(p, sub_mult)
        p = min(p, _round_up(n_planes, sub_mult))
    else:
        # Large planes: tile the lane axis; per-plane partials carried in scratch.
        p = sub_mult
        tl = (block_budget // (p * bpe)) // 128 * 128
        tl = max(tl, 128)
        tl = min(tl, l_pad)

    n_pb = pl.cdiv(n_planes, p)
    n_lt = pl.cdiv(plane_elems, tl)

    kernel = functools.partial(
        _wbce_kernel,
        plane_elems=plane_elems,
        n_planes=n_planes,
        block_p=p,
        block_l=tl,
        mask_planes=(n_planes % p != 0),
        mask_lanes=(plane_elems % tl != 0),
    )

    in_bytes = pred2.size * item_p + gt2.size * item_g

    partials = pl.pallas_call(
        kernel,
        out_shape=jax.ShapeDtypeStruct((n_pb, 1, 1), jnp.float32),
        grid_spec=pltpu.PrefetchScalarGridSpec(
            num_scalar_prefetch=0,
            grid=(n_pb, n_lt),
            in_specs=[
                pl.BlockSpec((p, tl), lambda i, l: (i, l)),
                pl.BlockSpec((p, tl), lambda i, l: (i, l)),
            ],
            out_specs=pl.BlockSpec((1, 1, 1), lambda i, l: (i, 0, 0)),
            scratch_shapes=[
                pltpu.VMEM((p, 1), jnp.float32),   # s_pos
                pltpu.VMEM((p, 1), jnp.float32),   # s_neg
                pltpu.VMEM((p, 1), jnp.float32),   # num_neg
            ],
        ),
        compiler_params=pltpu.CompilerParams(
            dimension_semantics=("parallel", "arbitrary"),
            vmem_limit_bytes=vmem_limit,
        ),
        cost_estimate=pl.CostEstimate(
            flops=10 * n_planes * plane_elems,
            transcendentals=n_planes * plane_elems,
            bytes_accessed=int(in_bytes) + int(n_pb) * 4,
        ),
    )(pred2, gt2)

    # 'mean' reduction over the true (unpadded) element count; per-block
    # partials are tree-summed here for better accumulation behaviour.
    return jnp.sum(partials) / jnp.float32(n_planes * plane_elems)


def _reference(pred, gt):
    # Pure-JAX reference reproducing the PyTorch module semantics.
    b, c, h, w = gt.shape
    total = float(h * w)
    gt = gt.astype(jnp.float32)
    pos = (gt == 1.0).astype(jnp.float32)
    neg = (gt == 0.0).astype(jnp.float32)
    num_neg = jnp.minimum(jnp.sum(neg, axis=(-1, -2)), float(int(h * w * 0.2)))
    num_pos = total - num_neg
    alpha_pos = 0.5 * total / num_pos
    alpha_neg = 0.5 * total / num_neg
    weights = (pos * alpha_pos[:, :, None, None]
               + neg * alpha_neg[:, :, None, None])
    log_p = jnp.maximum(jnp.log(pred), -100.0)
    log_1mp = jnp.maximum(jnp.log(1.0 - pred), -100.0)
    bce = -(gt * log_p + (1.0 - gt) * log_1mp)
    return jnp.mean(weights * bce)


if __name__ == "__main__":
    key = jax.random.PRNGKey(0)
    k1, k2 = jax.random.split(key)
    b, c, h, w = 2, 4, 16, 16

    # pred: probabilities in (0, 1); gt: binary mask with both 0s and 1s.
    pred = jax.nn.sigmoid(jax.random.normal(k1, (b, c, h, w), jnp.float32))
    gt = (jax.random.uniform(k2, (b, c, h, w)) > 0.5).astype(jnp.float32)

    loss = weight_balance_bce_loss(pred, gt)
    loss = jax.block_until_ready(loss)

    ref = _reference(pred, gt)
    assert jnp.allclose(loss, ref, rtol=1e-5, atol=1e-5), (loss, ref)

    print("KERNEL_OK")
</pallas_src>

<mosaic_0001>
module attributes {stable_mosaic.version = 11 : i64} {
  func.func @_wbce_kernel(%arg0: i32, %arg1: i32, %arg2: memref<8x256xf32, #tpu.memory_space<vmem>>, %arg3: memref<8x256xf32, #tpu.memory_space<vmem>>, %arg4: memref<1x1x1xf32, #tpu.memory_space<vmem>>, %arg5: memref<8x1xf32, #tpu.memory_space<vmem>>, %arg6: memref<8x1xf32, #tpu.memory_space<vmem>>, %arg7: memref<8x1xf32, #tpu.memory_space<vmem>>) attributes {dimension_semantics = [#tpu.dimension_semantics<parallel>, #tpu.dimension_semantics<arbitrary>], iteration_bounds = array<i64: 1, 1>, scalar_prefetch = 0 : i64, scratch_operands = 3 : i64, tpu.core_type = #tpu.core_type<tc>, window_params = [{transform_indices = @transform_0, window_bounds = array<i64: 8, 256>}, {transform_indices = @transform_1, window_bounds = array<i64: 8, 256>}, {transform_indices = @transform_2, window_bounds = array<i64: 1, 1, 1>}]} {
    %c0_i32 = arith.constant 0 : i32
    %0 = arith.cmpi eq, %arg1, %c0_i32 : i32
    %1 = arith.extui %0 : i1 to i32
    %c0_i32_0 = arith.constant 0 : i32
    %2 = arith.cmpi ne, %1, %c0_i32_0 : i32
    scf.if %2 {
      %cst_29 = arith.constant 0.000000e+00 : f32
      %42 = vector.broadcast %cst_29 : f32 to vector<8x1xf32>
      %c0_30 = arith.constant 0 : index
      %c0_31 = arith.constant 0 : index
      %43 = vector.load %arg5[%c0_30, %c0_31] : memref<8x1xf32, #tpu.memory_space<vmem>>, vector<8x1xf32>
      tpu.vector_store %arg5[%c0_30, %c0_31], %42 {strides = array<i32>} : memref<8x1xf32, #tpu.memory_space<vmem>>, vector<8x1xf32>,
      %cst_32 = arith.constant 0.000000e+00 : f32
      %44 = vector.broadcast %cst_32 : f32 to vector<8x1xf32>
      %c0_33 = arith.constant 0 : index
      %c0_34 = arith.constant 0 : index
      %45 = vector.load %arg6[%c0_33, %c0_34] : memref<8x1xf32, #tpu.memory_space<vmem>>, vector<8x1xf32>
      tpu.vector_store %arg6[%c0_33, %c0_34], %44 {strides = array<i32>} : memref<8x1xf32, #tpu.memory_space<vmem>>, vector<8x1xf32>,
      %cst_35 = arith.constant 0.000000e+00 : f32
      %46 = vector.broadcast %cst_35 : f32 to vector<8x1xf32>
      %c0_36 = arith.constant 0 : index
      %c0_37 = arith.constant 0 : index
      %47 = vector.load %arg7[%c0_36, %c0_37] : memref<8x1xf32, #tpu.memory_space<vmem>>, vector<8x1xf32>
      tpu.vector_store %arg7[%c0_36, %c0_37], %46 {strides = array<i32>} : memref<8x1xf32, #tpu.memory_space<vmem>>, vector<8x1xf32>,
    } else {
    }
    %c0 = arith.constant 0 : index
    %c0_1 = arith.constant 0 : index
    %3 = vector.load %arg2[%c0, %c0_1] : memref<8x256xf32, #tpu.memory_space<vmem>>, vector<8x256xf32>
    %c0_2 = arith.constant 0 : index
    %c0_3 = arith.constant 0 : index
    %4 = vector.load %arg3[%c0_2, %c0_3] : memref<8x256xf32, #tpu.memory_space<vmem>>, vector<8x256xf32>
    %cst = arith.constant 1.000000e+00 : f32
    %5 = vector.broadcast %cst : f32 to vector<8x256xf32>
    %6 = arith.cmpf oeq, %4, %5 : vector<8x256xf32>
    %cst_4 = arith.constant 0.000000e+00 : f32
    %7 = vector.broadcast %cst_4 : f32 to vector<8x256xf32>
    %8 = arith.cmpf oeq, %4, %7 : vector<8x256xf32>
    %cst_5 = arith.constant 1.000000e+00 : f32
    %9 = vector.broadcast %cst_5 : f32 to vector<8x256xf32>
    %10 = arith.subf %9, %3 : vector<8x256xf32>
    %11 = arith.select %6, %3, %10 : vector<8x256xi1>, vector<8x256xf32>
    %12 = math.log %11 : vector<8x256xf32>
    %cst_6 = arith.constant -1.000000e+02 : f32
    %13 = vector.broadcast %cst_6 : f32 to vector<8x256xf32>
    %14 = arith.maximumf %12, %13 : vector<8x256xf32>
    %cst_7 = arith.constant 0.000000e+00 : f32
    %15 = vector.broadcast %cst_7 : f32 to vector<8x256xf32>
    %16 = arith.subf %15, %14 : vector<8x256xf32>
    %c0_8 = arith.constant 0 : index
    %c0_9 = arith.constant 0 : index
    %17 = vector.load %arg5[%c0_8, %c0_9] : memref<8x1xf32, #tpu.memory_space<vmem>>, vector<8x1xf32>
    %cst_10 = arith.constant 0.000000e+00 : f32
    %18 = vector.broadcast %cst_10 : f32 to vector<8x256xf32>
    %19 = arith.select %6, %16, %18 : vector<8x256xi1>, vector<8x256xf32>
    %cst_11 = arith.constant dense<0.000000e+00> : vector<8xf32>
    %20 = vector.multi_reduction <add>, %19, %cst_11 [1] : vector<8x256xf32> to vector<8xf32>
    %21 = vector.shape_cast %20 : vector<8xf32> to vector<8x1xf32>
    %22 = arith.addf %17, %21 : vector<8x1xf32>
    %c0_12 = arith.constant 0 : index
    %c0_13 = arith.constant 0 : index
    %23 = vector.load %arg5[%c0_12, %c0_13] : memref<8x1xf32, #tpu.memory_space<vmem>>, vector<8x1xf32>
    tpu.vector_store %arg5[%c0_12, %c0_13], %22 {strides = array<i32>} : memref<8x1xf32, #tpu.memory_space<vmem>>, vector<8x1xf32>,
    %c0_14 = arith.constant 0 : index
    %c0_15 = arith.constant 0 : index
    %24 = vector.load %arg6[%c0_14, %c0_15] : memref<8x1xf32, #tpu.memory_space<vmem>>, vector<8x1xf32>
    %cst_16 = arith.constant 0.000000e+00 : f32
    %25 = vector.broadcast %cst_16 : f32 to vector<8x256xf32>
    %26 = arith.select %8, %16, %25 : vector<8x256xi1>, vector<8x256xf32>
    %cst_17 = arith.constant dense<0.000000e+00> : vector<8xf32>
    %27 = vector.multi_reduction <add>, %26, %cst_17 [1] : vector<8x256xf32> to vector<8xf32>
    %28 = vector.shape_cast %27 : vector<8xf32> to vector<8x1xf32>
    %29 = arith.addf %24, %28 : vector<8x1xf32>
    %c0_18 = arith.constant 0 : index
    %c0_19 = arith.constant 0 : index
    %30 = vector.load %arg6[%c0_18, %c0_19] : memref<8x1xf32, #tpu.memory_space<vmem>>, vector<8x1xf32>
    tpu.vector_store %arg6[%c0_18, %c0_19], %29 {strides = array<i32>} : memref<8x1xf32, #tpu.memory_space<vmem>>, vector<8x1xf32>,
    %c0_20 = arith.constant 0 : index
    %c0_21 = arith.constant 0 : index
    %31 = vector.load %arg7[%c0_20, %c0_21] : memref<8x1xf32, #tpu.memory_space<vmem>>, vector<8x1xf32>
    %cst_22 = arith.constant 1.000000e+00 : f32
    %cst_23 = arith.constant 0.000000e+00 : f32
    %32 = vector.broadcast %cst_22 : f32 to vector<8x256xf32>
    %33 = vector.broadcast %cst_23 : f32 to vector<8x256xf32>
    %34 = arith.select %8, %32, %33 : vector<8x256xi1>, vector<8x256xf32>
    %cst_24 = arith.constant dense<0.000000e+00> : vector<8xf32>
    %35 = vector.multi_reduction <add>, %34, %cst_24 [1] : vector<8x256xf32> to vector<8xf32>
    %36 = vector.shape_cast %35 : vector<8xf32> to vector<8x1xf32>
    %37 = arith.addf %31, %36 : vector<8x1xf32>
    %c0_25 = arith.constant 0 : index
    %c0_26 = arith.constant 0 : index
    %38 = vector.load %arg7[%c0_25, %c0_26] : memref<8x1xf32, #tpu.memory_space<vmem>>, vector<8x1xf32>
    tpu.vector_store %arg7[%c0_25, %c0_26], %37 {strides = array<i32>} : memref<8x1xf32, #tpu.memory_space<vmem>>, vector<8x1xf32>,
    %c0_i32_27 = arith.constant 0 : i32
    %39 = arith.cmpi eq, %arg1, %c0_i32_27 : i32
    %40 = arith.extui %39 : i1 to i32
    %c0_i32_28 = arith.constant 0 : i32
    %41 = arith.cmpi ne, %40, %c0_i32_28 : i32
    scf.if %41 {
      %c0_29 = arith.constant 0 : index
      %c0_30 = arith.constant 0 : index
      %42 = vector.load %arg7[%c0_29, %c0_30] : memref<8x1xf32, #tpu.memory_space<vmem>>, vector<8x1xf32>
      %cst_31 = arith.constant 5.100000e+01 : f32
      %43 = vector.broadcast %cst_31 : f32 to vector<8x1xf32>
      %44 = arith.minimumf %42, %43 : vector<8x1xf32>
      %cst_32 = arith.constant 2.560000e+02 : f32
      %45 = vector.broadcast %cst_32 : f32 to vector<8x1xf32>
      %46 = arith.subf %45, %44 : vector<8x1xf32>
      %cst_33 = arith.constant 5.000000e-01 : f32
      %cst_34 = arith.constant 2.560000e+02 : f32
      %47 = arith.mulf %cst_33, %cst_34 : f32
      %c0_35 = arith.constant 0 : index
      %c0_36 = arith.constant 0 : index
      %48 = vector.load %arg5[%c0_35, %c0_36] : memref<8x1xf32, #tpu.memory_space<vmem>>, vector<8x1xf32>
      %49 = arith.divf %48, %46 : vector<8x1xf32>
      %c0_37 = arith.constant 0 : index
      %c0_38 = arith.constant 0 : index
      %50 = vector.load %arg6[%c0_37, %c0_38] : memref<8x1xf32, #tpu.memory_space<vmem>>, vector<8x1xf32>
      %51 = arith.divf %50, %44 : vector<8x1xf32>
      %52 = arith.addf %49, %51 : vector<8x1xf32>
      %53 = vector.broadcast %47 : f32 to vector<8x1xf32>
      %54 = arith.mulf %53, %52 : vector<8x1xf32>
      %55 = vector.shape_cast %54 : vector<8x1xf32> to vector<1x8x1xf32>
      %cst_39 = arith.constant dense<0.000000e+00> : vector<1xf32>
      %56 = vector.multi_reduction <add>, %55, %cst_39 [1, 2] : vector<1x8x1xf32> to vector<1xf32>
      %57 = vector.shape_cast %56 : vector<1xf32> to vector<1x1x1xf32>
      %58 = vector.extract %57[0, 0, 0] : f32 from vector<1x1x1xf32>
      %59 = vector.broadcast %58 : f32 to vector<1x1x1xf32>
      %c0_40 = arith.constant 0 : index
      %c0_41 = arith.constant 0 : index
      %c0_42 = arith.constant 0 : index
      %60 = vector.load %arg4[%c0_40, %c0_41, %c0_42] : memref<1x1x1xf32, #tpu.memory_space<vmem>>, vector<1x1x1xf32>
      tpu.vector_store %arg4[%c0_40, %c0_41, %c0_42], %59 {strides = array<i32>} : memref<1x1x1xf32, #tpu.memory_space<vmem>>, vector<1x1x1xf32>,
    } else {
    }
    return
  }
  func.func @transform_0(%arg0: i32, %arg1: i32) -> (i32, i32) {
    %c0_i32 = arith.constant 0 : i32
    return %arg0, %arg1 : i32, i32
  }
  func.func @transform_1(%arg0: i32, %arg1: i32) -> (i32, i32) {
    %c0_i32 = arith.constant 0 : i32
    return %arg0, %arg1 : i32, i32
  }
  func.func @transform_2(%arg0: i32, %arg1: i32) -> (i32, i32, i32) {
    %c0_i32 = arith.constant 0 : i32
    %c0_i32_0 = arith.constant 0 : i32
    %c0_i32_1 = arith.constant 0 : i32
    return %arg0, %c0_i32, %c0_i32_0 : i32, i32, i32
  }
}

</mosaic_0001>

<llo_original>
// kernel: tpu_custom_call.1
$region0: #{tpu_custom_call.1}
  #allocation0 [shape = 'u32[]', space=smem, size = 0x4, offset = 0x4, fixed_abs, tag = 'smem constant byte address 0x4 - core index']
  #allocation1 [shape = 'u32[144,128]{1,0:T(1,128)}', space=vmem, size = 0x12000, scoped, tag = 'internal scratch']
  #allocation2 [shape = 'f32[8,1]{1,0:T(8,128)}', space=vmem, size = 0x1000, scoped, tag = 'scratch operand']
  #allocation3 [shape = 'f32[8,1]{1,0:T(8,128)}', space=vmem, size = 0x1000, scoped, tag = 'scratch operand']
  #allocation4 [shape = 'f32[8,1]{1,0:T(8,128)}', space=vmem, size = 0x1000, scoped, tag = 'scratch operand']
  %s0 = inlined_call_operand.hbm [shape: f32[8,256], index: 0, kind: input, shape index: {}]
  %s1 = inlined_call_operand.hbm [shape: f32[8,256], index: 1, kind: input, shape index: {}]
  %s2 = inlined_call_operand.hbm [shape: f32[1,1,1], index: 2, kind: output, shape index: {}]
  %s3 = sld [smem:[#allocation0]]
  $region34: #{tpu_custom_call.1} parent=0
    _
  %s5 = ssub.s32 1, %s3
  %s6 = scalar_select 0, %s5, %s3
  $region1: #{tpu_custom_call.1} parent=0
    #allocation5 [shape = 'u8[8192]{0}', space=vmem, size = 0x2000, scoped, tag = 'input window, operand 0, single buffered']
    #allocation6 [shape = 's32[1]{0}', space=sflag, size = 0x4, scoped, tag = 'scoped memory for tpu_custom_call.1']
    #allocation7 [shape = 's32[1]{0}', space=sflag, size = 0x4, scoped, tag = 'scoped memory for tpu_custom_call.1']
    #allocation8 [shape = 'u8[8192]{0}', space=vmem, size = 0x2000, scoped, tag = 'input window, operand 1, single buffered']
    #allocation9 [shape = 's32[1]{0}', space=sflag, size = 0x4, scoped, tag = 'scoped memory for tpu_custom_call.1']
    #allocation10 [shape = 'u8[512]{0}', space=vmem, size = 0x400, scoped, tag = 'output window, operand 0, single buffered']
    %7 = vsyncpa [#allocation6], 0
    %8 = vsyncpa [#allocation9], 0
    %9 = vsyncpa [#allocation7], 0
    // Predicated region
    $region2: #{tpu_custom_call.1} parent=1 // pred_check
      _
    $region3: #{tpu_custom_call.1} parent=1 // pred_check_branch
      %11 = sbr.rel (0) target = $region5
    $region4: #{tpu_custom_call.1} parent=1 // pred_region
      %s13 = ssub.s32 256, 256
      %14 = vsyncadd [#allocation6], %s13
      %s16 = sshll.u32 [#allocation5], 4
      %s17 = int_to_ptr.vmem [resolvable:$true] %s16
      %19 = dma.hbm_to_vmem [thread:$0]  %s0, 256, %s17, [#allocation6]
    $region5: #{tpu_custom_call.1} parent=1 // pred_fallthru
      _
    // Predicated region
    $region6: #{tpu_custom_call.1} parent=1 // pred_check
      _
    $region7: #{tpu_custom_call.1} parent=1 // pred_check_branch
      %21 = sbr.rel (0) target = $region9
    $region8: #{tpu_custom_call.1} parent=1 // pred_region
      %s23 = ssub.s32 256, 256
      %24 = vsyncadd [#allocation9], %s23
      %s26 = sshll.u32 [#allocation8], 4
      %s27 = int_to_ptr.vmem [resolvable:$true] %s26
      %29 = dma.hbm_to_vmem [thread:$0]  %s1, 256, %s27, [#allocation9]
    $region9: #{tpu_custom_call.1} parent=1 // pred_fallthru
      _
    // Predicated region
    $region10: #{tpu_custom_call.1} parent=1 // pred_check
      _
    $region11: #{tpu_custom_call.1} parent=1 // pred_check_branch
      %31 = sbr.rel (0) target = $region13
    $region12: #{tpu_custom_call.1} parent=1 // pred_region
      %32 = dma.done [#allocation6], 256
    $region13: #{tpu_custom_call.1} parent=1 // pred_fallthru
      _
    // Predicated region
    $region14: #{tpu_custom_call.1} parent=1 // pred_check
      _
    $region15: #{tpu_custom_call.1} parent=1 // pred_check_branch
      %34 = sbr.rel (0) target = $region17
    $region16: #{tpu_custom_call.1} parent=1 // pred_region
      %35 = dma.done [#allocation9], 256
    $region17: #{tpu_custom_call.1} parent=1 // pred_fallthru
      _
    %p36 = scmp.eq.s32.totalorder 0, 0
    // Predicated region
    $region18: #{tpu_custom_call.1} parent=1 // pred_check
      %p37 = pneg %p36
    $region19: #{tpu_custom_call.1} parent=1 // pred_check_branch
      %39 = sbr.rel (%p37) target = $region21
    $region20: #{tpu_custom_call.1} parent=1 // pred_region
      %vm40 = vcmask 7168
      %41 = vst.msk [vmem:[#allocation2] sm:$0xff] %vm40, 0.0
      %42 = vst.msk [vmem:[#allocation3] sm:$0xff] %vm40, 0.0
      %43 = vst.msk [vmem:[#allocation4] sm:$0xff] %vm40, 0.0
    $region21: #{tpu_custom_call.1} parent=1 // pred_fallthru
      _
    %v44 = vld [vmem:[#allocation5] sm:$0xff]
    %v45 = vld [vmem:[#allocation5 + $0x8] sm:$0xff]
    %v46 = vld [vmem:[#allocation8] sm:$0xff]
    %v47 = vld [vmem:[#allocation8 + $0x8] sm:$0xff]
    %vm48 = vcmp.eq.f32.partialorder %v46, 1.0
    %vm49 = vcmp.eq.f32.partialorder %v47, 1.0
    %vm50 = vcmp.eq.f32.partialorder %v46, 0.0
    %vm51 = vcmp.eq.f32.partialorder %v47, 0.0
    %v52 = vsub.f32 1.0, %v44
    %v53 = vsub.f32 1.0, %v45
    %v54 = vsel %vm48, %v44, %v52
    %v55 = vsel %vm49, %v45, %v53
    %v56 = vlog2.pop %v54
    %v57 = vmul.f32 %v56, 0.6931472
    %v58 = vlog2.pop %v55
    %v59 = vmul.f32 %v58, 0.6931472
    %v60 = vmax.f32 %v57, -100.0
    %v61 = vmax.f32 %v59, -100.0
    %v62 = vsub.f32 0.0, %v60
    %v63 = vsub.f32 0.0, %v61
    %v64 = vld [vmem:[#allocation2] sm:$0xff]
    %v65 = vsel %vm48, %v62, 0.0
    %v66 = vsel %vm49, %v63, 0.0
    %v67 = vadd.f32 %v65, %v66
    %68 = vadd.xlane.f32.xlu0 %v67
    %v69 = vpop.xlane.xlu0 %68
    %v70 = vadd.f32 %v64, %v69
    %vm71 = vcmask 7168
    %72 = vst.msk [vmem:[#allocation2] sm:$0xff] %vm71, %v70
    %v73 = vld [vmem:[#allocation3] sm:$0xff]
    %v74 = vsel %vm50, %v62, 0.0
    %v75 = vsel %vm51, %v63, 0.0
    %v76 = vadd.f32 %v74, %v75
    %77 = vadd.xlane.f32.xlu0 %v76
    %v78 = vpop.xlane.xlu0 %77
    %v79 = vadd.f32 %v73, %v78
    %80 = vst.msk [vmem:[#allocation3] sm:$0xff] %vm71, %v79
    %v81 = vld [vmem:[#allocation4] sm:$0xff]
    %v82 = vsel %vm50, 1.0, 0.0
    %v83 = vsel %vm51, 1.0, 0.0
    %v84 = vadd.f32 %v82, %v83
    %85 = vadd.xlane.f32.xlu0 %v84
    %v86 = vpop.xlane.xlu0 %85
    %v87 = vadd.f32 %v81, %v86
    %88 = vst.msk [vmem:[#allocation4] sm:$0xff] %vm71, %v87
    // Predicated region
    $region22: #{tpu_custom_call.1} parent=1 // pred_check
      %p89 = pneg %p36
    $region23: #{tpu_custom_call.1} parent=1 // pred_check_branch
      %91 = sbr.rel (%p89) target = $region25
    $region24: #{tpu_custom_call.1} parent=1 // pred_region
      %v92 = vld [vmem:[#allocation4] sm:$0xff]
      %v93 = vmin.f32 %v92, 51.0
      %v94 = vsub.f32 256.0, %v93
      %v95 = vld [vmem:[#allocation2] sm:$0xff]
      %v96 = vrcp.pop %v94
      %v97 = vmul.f32 %v95, %v96
      %v98 = vld [vmem:[#allocation3] sm:$0xff]
      %v99 = vrcp.pop %v93
      %v100 = vmul.f32 %v98, %v99
      %v101 = vadd.f32 %v97, %v100
      %v102 = vmul.f32 %v101, 128.0
      %v103 = vsel %vm71, %v102, 0.0
      %104 = vadd.xlane.f32.xlu0 %v103
      %v105 = vpop.xlane.xlu0 %104
      %v106 = vrot.slane %v105, 4
      %v107 = vadd.f32 %v105, %v106
      %v108 = vrot.slane %v107, 2
      %v109 = vadd.f32 %v107, %v108
      %v110 = vrot.slane %v109, 1
      %v111 = vadd.f32 %v109, %v110
      %s112 = vtos %v111
      %v113 = vstv %s112
      %vm114 = vcmask 0
      %115 = vst.msk [vmem:[#allocation10] sm:$0x1] %vm114, %v113
    $region25: #{tpu_custom_call.1} parent=1 // pred_fallthru
      _
    // Predicated region
    $region26: #{tpu_custom_call.1} parent=1 // pred_check
      _
    $region27: #{tpu_custom_call.1} parent=1 // pred_check_branch
      %117 = sbr.rel (0) target = $region29
    $region28: #{tpu_custom_call.1} parent=1 // pred_region
      %s119 = ssub.s32 16, 16
      %120 = vsyncadd [#allocation7], %s119
      %s122 = sshll.u32 [#allocation10], 4
      %s123 = int_to_ptr.vmem [resolvable:$true] %s122
      %125 = dma.vmem_to_hbm [thread:$0]  %s123, 16, %s2, [#allocation7]
    $region29: #{tpu_custom_call.1} parent=1 // pred_fallthru
      _
    // Predicated region
    $region30: #{tpu_custom_call.1} parent=1 // pred_check
      _
    $region31: #{tpu_custom_call.1} parent=1 // pred_check_branch
      %127 = sbr.rel (0) target = $region33
    $region32: #{tpu_custom_call.1} parent=1 // pred_region
      %128 = dma.done [#allocation7], 16
    $region33: #{tpu_custom_call.1} parent=1 // pred_fallthru
      _
    %129 = vsyncpa [#allocation6], 1
    %130 = vsyncpa [#allocation9], 1
    %131 = vsyncpa [#allocation7], 1

</llo_original>
